<compile_context>
chip_gen: v6e
topology: v6e:2x2x1
jax: 0.10.0
libtpu: 0.0.40
codegen_flags: <defaults>
</compile_context>

<pallas_src>
import math

import numpy as np

import jax
import jax.numpy as jnp
from jax.experimental import pallas as pl
from jax.experimental.pallas import tpu as pltpu


# ---------------------------------------------------------------------------
# Helpers
# ---------------------------------------------------------------------------
def _round_up(x, m):
    return ((x + m - 1) // m) * m


def _pick_block_h(heights, lanes_pad, itemsize, sublane):
    """Rows per output block: ~128 KiB blocks (far under the scoped-VMEM limit
    even double-buffered on v7x's 64 MiB), a multiple of the dtype's sublane
    tile, and small enough that the 'parallel' grid has >= 2 blocks whenever
    there is enough work (v7x has two TensorCores per chip)."""
    target_bytes = 128 * 1024
    bh = (target_bytes // (lanes_pad * itemsize)) // sublane * sublane
    bh = max(sublane, bh)
    total = sum(heights)
    if total >= 2 * sublane:
        bh = min(bh, max(sublane, (total // 2) // sublane * sublane))
    return bh


# ---------------------------------------------------------------------------
# Pallas kernel: one row-block of the level-concatenated, lane-padded slab
# ---------------------------------------------------------------------------
def _boxes_kernel(blk_level_ref, blk_row0_ref, x_const_ref, y_coef_ref, out_ref):
    """out[r, l] = (row0 + r) * y_coef[l] + x_const[l]

    x_const already contains the +0.5 half-pixel shift and the per-anchor
    [x1, y1, x2, y2] pixel offsets; y_coef is h_img / y_f_k on y lanes, 0 on
    x lanes.  blk_level is only consumed by the index maps.
    """
    del blk_level_ref
    g = pl.program_id(0)
    rows_i = jax.lax.broadcasted_iota(jnp.int32, out_ref.shape, 0) + blk_row0_ref[g]
    rows = rows_i.astype(jnp.float32)
    out_ref[...] = (rows * y_coef_ref[...] + x_const_ref[...]).astype(out_ref.dtype)


def _make_fused_boxes_fn(grid_sizes, anchors, lanes, row_starts, block_h,
                         lanes_pad, total_rows, out_dtype):
    """One pallas_call for the whole pyramid + the static slices / reshapes /
    concat that recover the torchvision (sum H*W*A, 4) layout — all compiled
    into a single jitted executable."""
    num_blocks = total_rows // block_h

    grid_spec = pltpu.PrefetchScalarGridSpec(
        num_scalar_prefetch=2,
        grid=(num_blocks,),
        in_specs=[
            # per-level lane constants, selected by the block's level id
            pl.BlockSpec((None, 1, lanes_pad), lambda g, lvl, r0: (lvl[g], 0, 0)),
            pl.BlockSpec((None, 1, lanes_pad), lambda g, lvl, r0: (lvl[g], 0, 0)),
        ],
        out_specs=pl.BlockSpec((block_h, lanes_pad), lambda g, lvl, r0: (g, 0)),
    )
    call = pl.pallas_call(
        _boxes_kernel,
        out_shape=jax.ShapeDtypeStruct((total_rows, lanes_pad), out_dtype),
        grid_spec=grid_spec,
        compiler_params=pltpu.CompilerParams(dimension_semantics=("parallel",)),
    )

    @jax.jit
    def run(blk_level, blk_row0, x_const, y_coef):
        slab = call(blk_level, blk_row0, x_const, y_coef)
        parts = []
        for k, (h, w) in enumerate(grid_sizes):
            a, ln, r0 = anchors[k], lanes[k], row_starts[k]
            # (H, W*A*4) row-major is identical to the torch (H*W*A, 4) layout
            parts.append(slab[r0:r0 + h, :ln].reshape(h * w * a, 4))
        return jnp.concatenate(parts, axis=0)

    return run


# ---------------------------------------------------------------------------
# Module-equivalent wrapper (static scalar setup / glue in Python / numpy)
# ---------------------------------------------------------------------------
class DefaultBoxGenerator:
    def __init__(self, aspect_ratios, min_ratio=0.15, max_ratio=0.9,
                 scales=None, steps=None, clip=True):
        if steps is not None and len(aspect_ratios) != len(steps):
            raise ValueError("aspect_ratios and steps should have the same length")
        self.aspect_ratios = aspect_ratios
        self.steps = steps
        self.clip = clip
        num_outputs = len(aspect_ratios)
        if scales is None:
            if num_outputs > 1:
                range_ratio = max_ratio - min_ratio
                self.scales = [min_ratio + range_ratio * k / (num_outputs - 1.0)
                               for k in range(num_outputs)]
                self.scales.append(1.0)
            else:
                self.scales = [min_ratio, max_ratio]
        else:
            self.scales = scales
        self._wh_pairs = self._generate_wh_pairs(num_outputs)
        self._cache = {}   # (grid_sizes, image_size, dtype) -> default boxes

    def _generate_wh_pairs(self, num_outputs):
        pairs = []
        for k in range(num_outputs):
            s_k = self.scales[k]
            s_prime_k = math.sqrt(self.scales[k] * self.scales[k + 1])
            wh = [[s_k, s_k], [s_prime_k, s_prime_k]]
            for ar in self.aspect_ratios[k]:
                sq_ar = math.sqrt(ar)
                w = self.scales[k] * sq_ar
                h = self.scales[k] / sq_ar
                wh.extend([[w, h], [h, w]])
            pairs.append(np.asarray(wh, dtype=np.float32))
        return pairs

    def num_anchors_per_location(self):
        return [2 + 2 * len(r) for r in self.aspect_ratios]

    # ---- static per-lane constants for one level -------------------------
    def _lane_constants(self, k, h, w, image_size, lanes_pad):
        h_img, w_img = float(image_size[0]), float(image_size[1])
        if self.steps is not None:
            x_f_k = w_img / self.steps[k]
            y_f_k = h_img / self.steps[k]
        else:
            y_f_k, x_f_k = float(h), float(w)

        wh = np.asarray(self._wh_pairs[k], dtype=np.float64)
        if self.clip:
            wh = np.clip(wh, 0.0, 1.0)
        num_a = wh.shape[0]
        ws, hs = wh[:, 0], wh[:, 1]

        cx = (np.arange(w, dtype=np.float64) + 0.5) * (w_img / x_f_k)   # (W,) px
        y_scale = h_img / y_f_k

        x_const = np.zeros((w, num_a, 4), dtype=np.float64)
        y_coef = np.zeros((w, num_a, 4), dtype=np.float64)
        x_const[:, :, 0] = cx[:, None] - 0.5 * ws[None, :] * w_img
        x_const[:, :, 2] = cx[:, None] + 0.5 * ws[None, :] * w_img
        x_const[:, :, 1] = -0.5 * hs[None, :] * h_img
        x_const[:, :, 3] = +0.5 * hs[None, :] * h_img
        y_coef[:, :, 1] = y_scale
        y_coef[:, :, 3] = y_scale

        # fold the (row + 0.5) half-pixel shift into the constant term so the
        # kernel body is just  row_int * y_coef + x_const'
        x_const = x_const + 0.5 * y_coef

        lanes = w * num_a * 4
        xc = np.zeros((lanes_pad,), np.float32)
        yc = np.zeros((lanes_pad,), np.float32)
        xc[:lanes] = x_const.reshape(-1).astype(np.float32)
        yc[:lanes] = y_coef.reshape(-1).astype(np.float32)
        return xc, yc, num_a, lanes

    def _default_boxes(self, grid_sizes, image_size, dtype):
        key = (tuple(grid_sizes), tuple(image_size), jnp.dtype(dtype).name)
        if key in self._cache:
            return self._cache[key]

        out_dtype = jnp.dtype(dtype)
        itemsize = out_dtype.itemsize
        sublane = {4: 8, 2: 16, 1: 32}.get(itemsize, 8)

        num_levels = len(grid_sizes)
        raw_lanes = [w * self._wh_pairs[k].shape[0] * 4
                     for k, (h, w) in enumerate(grid_sizes)]
        lanes_pad = max(128, max(_round_up(l, 128) for l in raw_lanes))

        heights = [h for (h, _) in grid_sizes]
        block_h = _pick_block_h(heights, lanes_pad, itemsize, sublane)

        # pad each level's rows to a multiple of block_h so every grid block
        # belongs to exactly one level (padding rows are sliced away later)
        hpads = [_round_up(h, block_h) for h in heights]
        row_starts = [int(s) for s in np.cumsum([0] + hpads[:-1])]
        total_rows = int(sum(hpads))
        num_blocks = total_rows // block_h

        x_const = np.zeros((num_levels, 1, lanes_pad), np.float32)
        y_coef = np.zeros((num_levels, 1, lanes_pad), np.float32)
        anchors, lanes = [], []
        for k, (h, w) in enumerate(grid_sizes):
            xc, yc, num_a, ln = self._lane_constants(k, h, w, image_size, lanes_pad)
            x_const[k, 0] = xc
            y_coef[k, 0] = yc
            anchors.append(num_a)
            lanes.append(ln)

        blk_level = np.zeros((num_blocks,), np.int32)
        blk_row0 = np.zeros((num_blocks,), np.int32)
        g = 0
        for k in range(num_levels):
            for b in range(hpads[k] // block_h):
                blk_level[g] = k
                blk_row0[g] = b * block_h
                g += 1

        run = _make_fused_boxes_fn(tuple(grid_sizes), tuple(anchors),
                                   tuple(lanes), tuple(row_starts), block_h,
                                   lanes_pad, total_rows, out_dtype)
        boxes = run(jnp.asarray(blk_level), jnp.asarray(blk_row0),
                    jnp.asarray(x_const), jnp.asarray(y_coef))
        self._cache[key] = boxes
        return boxes

    def __call__(self, image_tensors, image_sizes, feature_maps):
        """
        image_tensors : (N, C, Himg, Wimg)        (ImageList.tensors)
        image_sizes   : list of (h, w) per image  (ImageList.image_sizes)
        feature_maps  : list of (N, C_k, H_k, W_k) arrays
        returns       : list (len N) of (sum_k H_k*W_k*A_k, 4) boxes (xyxy, px)
        """
        grid_sizes = tuple((int(fm.shape[-2]), int(fm.shape[-1])) for fm in feature_maps)
        image_size = (int(image_tensors.shape[-2]), int(image_tensors.shape[-1]))
        dtype = feature_maps[0].dtype
        # TODO(synk): bf16 feature maps lose precision on pixel-scale coords
        # (mirrors torchvision dtype behavior); exact-match checks need f32.
        boxes = self._default_boxes(grid_sizes, image_size, dtype)
        return [boxes for _ in image_sizes]


# ---------------------------------------------------------------------------
# Pure-numpy reference mirroring the torchvision implementation
# ---------------------------------------------------------------------------
def _ref_default_boxes(gen, grid_sizes, image_size):
    parts = []
    for k, (h, w) in enumerate(grid_sizes):
        if gen.steps is not None:
            x_f_k = image_size[1] / gen.steps[k]
            y_f_k = image_size[0] / gen.steps[k]
        else:
            y_f_k, x_f_k = float(h), float(w)
        shifts_x = ((np.arange(w, dtype=np.float32) + 0.5) / np.float32(x_f_k)).astype(np.float32)
        shifts_y = ((np.arange(h, dtype=np.float32) + 0.5) / np.float32(y_f_k)).astype(np.float32)
        sy, sx = np.meshgrid(shifts_y, shifts_x, indexing="ij")
        sx = sx.reshape(-1)
        sy = sy.reshape(-1)
        num_a = gen._wh_pairs[k].shape[0]
        shifts = np.stack((sx, sy) * num_a, axis=-1).reshape(-1, 2)
        wh = np.clip(gen._wh_pairs[k], 0.0, 1.0) if gen.clip else gen._wh_pairs[k]
        wh_rep = np.tile(wh, (h * w, 1))
        parts.append(np.concatenate((shifts, wh_rep), axis=1))
    db = np.concatenate(parts, axis=0).astype(np.float32)
    xy = np.array([image_size[1], image_size[0]], dtype=np.float32)
    return np.concatenate([(db[:, :2] - 0.5 * db[:, 2:]) * xy,
                           (db[:, :2] + 0.5 * db[:, 2:]) * xy], axis=-1)


if __name__ == "__main__":
    key = jax.random.PRNGKey(0)
    k1, k2, k3 = jax.random.split(key, 3)

    batch = 2
    # ImageList: padded image batch + per-image sizes
    images = jax.random.normal(k1, (batch, 3, 64, 64), dtype=jnp.float32)
    image_sizes = [(64, 64), (60, 62)]

    # Two feature maps (NCHW), small shapes
    fmap0 = jax.random.normal(k2, (batch, 4, 16, 16), dtype=jnp.float32)
    fmap1 = jax.random.normal(k3, (batch, 4, 8, 8), dtype=jnp.float32)
    feature_maps = [fmap0, fmap1]

    gen = DefaultBoxGenerator(aspect_ratios=[[2], [2, 3]])

    dboxes = gen(images, image_sizes, feature_maps)
    dboxes = [jax.block_until_ready(d) for d in dboxes]

    # second call hits the shape-static cache (no extra kernel launches)
    dboxes2 = gen(images, image_sizes, feature_maps)

    # correctness check vs torch-order reference
    grid_sizes = [(16, 16), (8, 8)]
    image_size = (64, 64)
    ref = _ref_default_boxes(gen, grid_sizes, image_size)

    expected_rows = sum(h * w * a for (h, w), a in
                        zip(grid_sizes, gen.num_anchors_per_location()))
    assert len(dboxes) == batch
    assert dboxes[0].shape == (expected_rows, 4)
    assert np.allclose(np.asarray(dboxes[0]), ref, rtol=1e-5, atol=1e-3), "mismatch vs reference"
    assert np.allclose(np.asarray(dboxes[1]), ref, rtol=1e-5, atol=1e-3), "mismatch vs reference"
    assert dboxes2[0] is dboxes[0], "shape-static cache not hit"

    print("KERNEL_OK")
</pallas_src>

<mosaic_0001>
module attributes {stable_mosaic.version = 11 : i64} {
  func.func @_boxes_kernel(%arg0: i32, %arg1: memref<3xi32, #tpu.memory_space<smem>>, %arg2: memref<3xi32, #tpu.memory_space<smem>>, %arg3: memref<1x1x256xf32, #tpu.memory_space<vmem>>, %arg4: memref<1x1x256xf32, #tpu.memory_space<vmem>>, %arg5: memref<8x256xf32, #tpu.memory_space<vmem>>) attributes {dimension_semantics = [#tpu.dimension_semantics<parallel>], iteration_bounds = array<i64: 3>, scalar_prefetch = 2 : i64, scratch_operands = 0 : i64, tpu.core_type = #tpu.core_type<tc>, window_params = [{transform_indices = @transform_0, window_bounds = array<i64: 1, 1, 256>}, {transform_indices = @transform_1, window_bounds = array<i64: 1, 1, 256>}, {transform_indices = @transform_2, window_bounds = array<i64: 8, 256>}]} {
    %0 = tpu.iota {dimensions = array<i32: 0>} : vector<8x256xi32>
    %1 = arith.index_cast %arg0 : i32 to index
    %2 = memref.load %arg2[%1] : memref<3xi32, #tpu.memory_space<smem>>
    %3 = vector.broadcast %2 : i32 to vector<8x256xi32>
    %4 = arith.addi %0, %3 : vector<8x256xi32>
    %5 = arith.sitofp %4 : vector<8x256xi32> to vector<8x256xf32>
    %c0 = arith.constant 0 : index
    %c0_0 = arith.constant 0 : index
    %c0_1 = arith.constant 0 : index
    %6 = vector.load %arg4[%c0, %c0_0, %c0_1] : memref<1x1x256xf32, #tpu.memory_space<vmem>>, vector<1x1x256xf32>
    %7 = vector.shape_cast %6 : vector<1x1x256xf32> to vector<1x256xf32>
    %8 = vector.broadcast %7 : vector<1x256xf32> to vector<8x256xf32>
    %9 = arith.mulf %5, %8 : vector<8x256xf32>
    %c0_2 = arith.constant 0 : index
    %c0_3 = arith.constant 0 : index
    %c0_4 = arith.constant 0 : index
    %10 = vector.load %arg3[%c0_2, %c0_3, %c0_4] : memref<1x1x256xf32, #tpu.memory_space<vmem>>, vector<1x1x256xf32>
    %11 = vector.shape_cast %10 : vector<1x1x256xf32> to vector<1x256xf32>
    %12 = vector.broadcast %11 : vector<1x256xf32> to vector<8x256xf32>
    %13 = arith.addf %9, %12 : vector<8x256xf32>
    %c0_5 = arith.constant 0 : index
    %c0_6 = arith.constant 0 : index
    %14 = vector.load %arg5[%c0_5, %c0_6] : memref<8x256xf32, #tpu.memory_space<vmem>>, vector<8x256xf32>
    tpu.vector_store %arg5[%c0_5, %c0_6], %13 {strides = array<i32>} : memref<8x256xf32, #tpu.memory_space<vmem>>, vector<8x256xf32>,
    return
  }
  func.func @transform_0(%arg0: i32, %arg1: memref<3xi32, #tpu.memory_space<smem>>, %arg2: memref<3xi32, #tpu.memory_space<smem>>) -> (i32, i32, i32) {
    %0 = arith.index_cast %arg0 : i32 to index
    %1 = memref.load %arg1[%0] : memref<3xi32, #tpu.memory_space<smem>>
    %c0_i32 = arith.constant 0 : i32
    %c0_i32_0 = arith.constant 0 : i32
    %c0_i32_1 = arith.constant 0 : i32
    return %1, %c0_i32, %c0_i32_0 : i32, i32, i32
  }
  func.func @transform_1(%arg0: i32, %arg1: memref<3xi32, #tpu.memory_space<smem>>, %arg2: memref<3xi32, #tpu.memory_space<smem>>) -> (i32, i32, i32) {
    %0 = arith.index_cast %arg0 : i32 to index
    %1 = memref.load %arg1[%0] : memref<3xi32, #tpu.memory_space<smem>>
    %c0_i32 = arith.constant 0 : i32
    %c0_i32_0 = arith.constant 0 : i32
    %c0_i32_1 = arith.constant 0 : i32
    return %1, %c0_i32, %c0_i32_0 : i32, i32, i32
  }
  func.func @transform_2(%arg0: i32, %arg1: memref<3xi32, #tpu.memory_space<smem>>, %arg2: memref<3xi32, #tpu.memory_space<smem>>) -> (i32, i32) {
    %c0_i32 = arith.constant 0 : i32
    %c0_i32_0 = arith.constant 0 : i32
    return %arg0, %c0_i32 : i32, i32
  }
}

</mosaic_0001>

<llo_original>
// kernel: run.1
$region0: #{run.1}
  #allocation0 [shape = 'u32[]', space=smem, size = 0x4, offset = 0x4, fixed_abs, tag = 'smem constant byte address 0x4 - core index']
  #allocation1 [shape = 'u32[144,128]{1,0:T(1,128)}', space=vmem, size = 0x12000, scoped, tag = 'internal scratch']
  #allocation2 [shape = 's32[1]{0}', space=sflag, size = 0x4, scoped, tag = 'scoped memory for run.1']
  #allocation3 [shape = 'u8[512]{0}', space=smem, size = 0x200, scoped, tag = 'prefetched SMEM operand 0']
  #allocation4 [shape = 'u8[512]{0}', space=smem, size = 0x200, scoped, tag = 'prefetched SMEM operand 1']
  %s0 = inlined_call_operand.hbm [shape: s32[3], index: 0, kind: input, shape index: {}]
  %s1 = inlined_call_operand.vmem [shape: s32[3], index: 1, kind: input, shape index: {}]
  %s2 = inlined_call_operand.hbm [shape: f32[2,1,256], index: 2, kind: input, shape index: {}]
  %s3 = inlined_call_operand.vmem [shape: f32[2,1,256], index: 3, kind: input, shape index: {}]
  %s4 = inlined_call_operand.vmem [shape: f32[24,256], index: 4, kind: output, shape index: {}]
  %s5 = sld [smem:[#allocation0]]
  $region45: #{run.1} parent=0
    _
  %s7 = ssub.s32 1, %s5
  %s8 = scalar_select 0, %s7, %s5
  %10 = dma.hbm_to_smem %s0, 16, [#allocation3], [#allocation2]
  %s11 = sshll.u32 %s1, 4
  %s12 = int_to_ptr.vmem [resolvable:$true] %s11
  %14 = dma.vmem_to_smem %s12, 16, [#allocation4], [#allocation2]
  %15 = dma.done [#allocation2], 32
  %16 = sfence
  $region1: #{run.1} parent=0
    #allocation5 [shape = 'u8[2048]{0}', space=vmem, size = 0x800, scoped, tag = 'input window, operand 2']
    #allocation6 [shape = 's32[2]{0}', space=sflag, size = 0x8, scoped, tag = 'scoped memory for run.1']
    %17 = vsyncpa [#allocation6], 0
    %s18 = scalar_lea.sflag [#allocation6], 1
    %19 = vsyncpa %s18, 0
    loop: start=0, step=1, limit=5
    $region2: #{run.1} parent=1 // loop_pre_header
      _
    $region3: #{run.1} parent=1 // loop_header
      %s21 = sphi 0, %s25
      %p22 = scmp.ge.s32.totalorder %s21, 5
      %s33 = sphi 0, %s35
      %s36 = sphi 0, %s33
      %s37 = sphi 0, %s36
      %s53 = sphi 0, %s37
      %s61 = sphi 0, %s63
      %s64 = sphi 0, %s61
      %s65 = sphi 0, %s64
      %s81 = sphi 0, %s65
      %s87 = sphi 0, %s89
      %s90 = sphi 0, %s87
      %s91 = sphi 0, %s90
      %s107 = sphi 0, %s91
    $region4: #{run.1} parent=1 // loop_header_branch
      %24 = sbr.rel (%p22) target = $region8
    $region5: #{run.1} parent=1 // loop_body
      %s26 = ssub.s32 %s21, 1
      %s27 = ssub.s32 %s21, 2
      %s28 = sadd.s32 %s21, 1
      %s29 = sld [smem:[#allocation3 + %s21]]
      %s30 = sld [smem:[#allocation3 + %s28]]
      %s31 = ssub.s32 %s29, %s30
      %p32 = scmp.eq.s32.totalorder %s31, 0
      %s34 = sadd.s32 %s33, 1
      %s35 = scalar_select %p32, %s33, %s34
      %p38 = pneg %p32
      %p39 = scmp.eq.s32.totalorder %s21, 2
      %p40 = por %p38, %p39
      %p41 = scmp.ne.s32.totalorder %s33, %s36
      %p42 = scmp.eq.s32.totalorder %s21, 0
      %p43 = por %p41, %p42
      %p44 = scmp.ne.s32.totalorder %s33, %s36
      %p45 = scmp.eq.s32.totalorder %s26, 2
      %p46 = por %p44, %p45
      %p47 = scmp.ne.s32.totalorder %s36, %s37
      %p48 = scmp.eq.s32.totalorder %s26, 0
      %p49 = por %p47, %p48
      %p50 = scmp.ne.s32.totalorder %s36, %s37
      %p51 = scmp.eq.s32.totalorder %s27, 2
      %p52 = por %p50, %p51
      %p54 = scmp.ne.s32.totalorder %s37, %s53
      %p55 = scmp.eq.s32.totalorder %s27, 0
      %p56 = por %p54, %p55
      %s57 = sld [smem:[#allocation3 + %s21]]
      %s58 = sld [smem:[#allocation3 + %s28]]
      %s59 = ssub.s32 %s57, %s58
      %p60 = scmp.eq.s32.totalorder %s59, 0
      %s62 = sadd.s32 %s61, 1
      %s63 = scalar_select %p60, %s61, %s62
      %p66 = pneg %p60
      %p67 = scmp.eq.s32.totalorder %s21, 2
      %p68 = por %p66, %p67
      %p69 = scmp.ne.s32.totalorder %s61, %s64
      %p70 = scmp.eq.s32.totalorder %s21, 0
      %p71 = por %p69, %p70
      %p72 = scmp.ne.s32.totalorder %s61, %s64
      %p73 = scmp.eq.s32.totalorder %s26, 2
      %p74 = por %p72, %p73
      %p75 = scmp.ne.s32.totalorder %s64, %s65
      %p76 = scmp.eq.s32.totalorder %s26, 0
      %p77 = por %p75, %p76
      %p78 = scmp.ne.s32.totalorder %s64, %s65
      %p79 = scmp.eq.s32.totalorder %s27, 2
      %p80 = por %p78, %p79
      %p82 = scmp.ne.s32.totalorder %s65, %s81
      %p83 = scmp.eq.s32.totalorder %s27, 0
      %p84 = por %p82, %p83
      %s85 = ssub.s32 %s21, %s28
      %p86 = scmp.eq.s32.totalorder %s85, 0
      %s88 = sadd.s32 %s87, 1
      %s89 = scalar_select %p86, %s87, %s88
      %p92 = pneg %p86
      %p93 = scmp.eq.s32.totalorder %s21, 2
      %p94 = por %p92, %p93
      %p95 = scmp.ne.s32.totalorder %s87, %s90
      %p96 = scmp.eq.s32.totalorder %s21, 0
      %p97 = por %p95, %p96
      %p98 = scmp.ne.s32.totalorder %s87, %s90
      %p99 = scmp.eq.s32.totalorder %s26, 2
      %p100 = por %p98, %p99
      %p101 = scmp.ne.s32.totalorder %s90, %s91
      %p102 = scmp.eq.s32.totalorder %s26, 0
      %p103 = por %p101, %p102
      %p104 = scmp.ne.s32.totalorder %s90, %s91
      %p105 = scmp.eq.s32.totalorder %s27, 2
      %p106 = por %p104, %p105
      %p108 = scmp.ne.s32.totalorder %s91, %s107
      %p109 = scmp.eq.s32.totalorder %s27, 0
      %p110 = por %p108, %p109
      %p111 = scmp.le.s32.totalorder 1, %s21
      %p112 = scmp.lt.s32.totalorder %s21, 4
      %p113 = pnand %p111, %p112
      %p114 = pneg %p113
      // Predicated region
      $region9: #{run.1} parent=5 // pred_check
        _
      $region10: #{run.1} parent=5 // pred_check_branch
        %116 = sbr.rel (%p113) target = $region12
      $region11: #{run.1} parent=5 // pred_region
        %s117 = ssub.s32 %s21, 1
      $region12: #{run.1} parent=5 // pred_fallthru
        _
      %p118 = scmp.lt.s32.totalorder %s21, 3
      // Predicated region
      $region13: #{run.1} parent=5 // pred_check
        %p119 = pneg %p118
      $region14: #{run.1} parent=5 // pred_check_branch
        %121 = sbr.rel (%p119) target = $region16
      $region15: #{run.1} parent=5 // pred_region
        // Predicated region
        $region17: #{run.1} parent=15 // pred_check
          %p122 = pneg %p43
        $region18: #{run.1} parent=15 // pred_check_branch
          %124 = sbr.rel (%p122) target = $region20
        $region19: #{run.1} parent=15 // pred_region
          %s125 = sand.u32 %s33, 1
          %s126 = scalar_lea.sflag [#allocation6], %s125
          %s127 = sand.u32 %s33, 1
          %s128 = smul.addr %s127, 2
          %s129 = scalar_lea.vmem [#allocation5], %s128
          %s130 = sld [smem:[#allocation3 + %s21]]
          %s132 = ssub.s32 32, 32
          %133 = vsyncadd %s126, %s132
          %s134 = smul.addr %s130, 2
          %s135 = smul.addr %s134, 16
          %s136 = scalar_lea.hbm %s2, %s135
          %s138 = sshll.u32 %s129, 4
          %s139 = int_to_ptr.vmem [resolvable:$true] %s138
          %141 = dma.hbm_to_vmem [thread:$0]  %s136, 32, %s139, %s126
        $region20: #{run.1} parent=15 // pred_fallthru
          _
        // Predicated region
        $region21: #{run.1} parent=15 // pred_check
          %p142 = pneg %p71
        $region22: #{run.1} parent=15 // pred_check_branch
          %144 = sbr.rel (%p142) target = $region24
        $region23: #{run.1} parent=15 // pred_region
          %s145 = sld [smem:[#allocation3 + %s21]]
          %p146 = scmp.lt.s32.totalorder %s145, 1
          %s147 = scalar_select %p146, %s145, 1
          %s148 = smul.addr %s147, 2
          %s149 = scalar_lea.vmem %s3, %s148
          %s150 = sld [smem:[#allocation3 + %s21]]
        $region24: #{run.1} parent=15 // pred_fallthru
          _
      $region16: #{run.1} parent=5 // pred_fallthru
        _
      %p151 = scmp.le.s32.totalorder 1, %s21
      %p152 = scmp.lt.s32.totalorder %s21, 4
      %p153 = pnand %p151, %p152
      %p154 = pneg %p153
      // Predicated region
      $region25: #{run.1} parent=5 // pred_check
        _
      $region26: #{run.1} parent=5 // pred_check_branch
        %156 = sbr.rel (%p153) target = $region28
      $region27: #{run.1} parent=5 // pred_region
        %s157 = ssub.s32 %s21, 1
        %s158 = sand.u32 %s36, 1
        %s159 = scalar_lea.sflag [#allocation6], %s158
        %s160 = sand.u32 %s36, 1
        %s161 = smul.addr %s160, 2
        %s162 = scalar_lea.vmem [#allocation5], %s161
        // Predicated region
        $region29: #{run.1} parent=27 // pred_check
          %p163 = pneg %p49
        $region30: #{run.1} parent=27 // pred_check_branch
          %165 = sbr.rel (%p163) target = $region32
        $region31: #{run.1} parent=27 // pred_region
          %166 = dma.done %s159, 32
        $region32: #{run.1} parent=27 // pred_fallthru
          _
        %s167 = sand.u32 %s36, 1
        %s168 = scalar_lea.sflag [#allocation6], %s167
        %s169 = sand.u32 %s36, 1
        %s170 = smul.addr %s169, 2
        %s171 = scalar_lea.vmem [#allocation5], %s170
        %p172 = pneg %p49
        %p173 = pneg %p46
        %s174 = sld [smem:[#allocation3 + %s26]]
        %p175 = scmp.lt.s32.totalorder %s174, 1
        %s176 = scalar_select %p175, %s174, 1
        %s177 = smul.addr %s176, 2
        %s178 = scalar_lea.vmem %s3, %s177
        %p179 = pneg %p77
        %p180 = pneg %p74
        %p181 = pneg %p103
        %p182 = pneg %p100
        %p183 = scmp.lt.s32.totalorder %s26, 2
        %s184 = scalar_select %p183, %s26, 2
        %s185 = smul.addr %s184, 2
        %s186 = smul.addr %s185, 8
        %s187 = scalar_lea.vmem %s4, %s186
        %s188 = sld [smem:[#allocation3 + %s26]]
        %s189 = sld [smem:[#allocation3 + %s26]]
        %p190 = scmp.lt.s32.totalorder %s189, 1
        %s191 = scalar_select %p190, %s189, 1
        %s192 = smul.addr %s191, 2
        %s193 = scalar_lea.vmem %s3, %s192
        %s194 = sld [smem:[#allocation3 + %s26]]
        %p195 = scmp.lt.s32.totalorder %s26, 2
        %s196 = scalar_select %p195, %s26, 2
        %s197 = smul.addr %s196, 2
        %s198 = smul.addr %s197, 8
        %s199 = scalar_lea.vmem %s4, %s198
        %v200 = vlaneseq
        %v201 = vshrl.u32 %v200, 7
        %s202 = sld [smem:[#allocation4 + %s26]]
        %v203 = vstv %s202
        %v204 = vadd.s32 %v201, %v203
        %v205 = vcvt.s32.f32 %v204
        %v206 = vld [vmem:[%s193] sm:$0x3]
        %v208 = vlaneseq
        %v209 = vshrl.u32 %v208, 7
        %v210 = vsub.s32 0, %v209
        %v211 = vrot.slane %v206, %v210
        %v212 = vlaneseq
        %v213 = vshrl.u32 %v212, 7
        %v214 = vsub.s32 1, %v213
        %v215 = vrot.slane %v206, %v214
        %v218 = vmul.f32 %v205, %v211
        %v219 = vmul.f32 %v205, %v215
        %v220 = vld [vmem:[%s162] sm:$0x3]
        %v222 = vlaneseq
        %v223 = vshrl.u32 %v222, 7
        %v224 = vsub.s32 0, %v223
        %v225 = vrot.slane %v220, %v224
        %v226 = vlaneseq
        %v227 = vshrl.u32 %v226, 7
        %v228 = vsub.s32 1, %v227
        %v229 = vrot.slane %v220, %v228
        %v232 = vadd.f32 %v218, %v225
        %v233 = vadd.f32 %v219, %v229
        %234 = vst [vmem:[%s199] sm:$0xff] %v232
        %235 = vst [vmem:[%s199 + $0x8] sm:$0xff] %v233
        %p236 = scmp.lt.s32.totalorder %s26, 2
        %s237 = scalar_select %p236, %s26, 2
        %s238 = smul.addr %s237, 2
        %s239 = smul.addr %s238, 8
        %s240 = scalar_lea.vmem %s4, %s239
        // Predicated region
        $region33: #{run.1} parent=27 // pred_check
          %p241 = pneg %p100
        $region34: #{run.1} parent=27 // pred_check_branch
          %243 = sbr.rel (%p241) target = $region36
        $region35: #{run.1} parent=27 // pred_region
          _
        $region36: #{run.1} parent=27 // pred_fallthru
          _
      $region28: #{run.1} parent=5 // pred_fallthru
        _
      %p244 = scmp.le.s32.totalorder 2, %s21
      // Predicated region
      $region37: #{run.1} parent=5 // pred_check
        %p245 = pneg %p244
      $region38: #{run.1} parent=5 // pred_check_branch
        %247 = sbr.rel (%p245) target = $region40
      $region39: #{run.1} parent=5 // pred_region
        %s248 = ssub.s32 %s21, 2
        // Predicated region
        $region41: #{run.1} parent=39 // pred_check
          %p249 = pneg %p106
        $region42: #{run.1} parent=39 // pred_check_branch
          %251 = sbr.rel (%p249) target = $region44
        $region43: #{run.1} parent=39 // pred_region
          %p252 = scmp.lt.s32.totalorder %s27, 2
          %s253 = scalar_select %p252, %s27, 2
          %s254 = smul.addr %s253, 2
          %s255 = smul.addr %s254, 8
          %s256 = scalar_lea.vmem %s4, %s255
        $region44: #{run.1} parent=39 // pred_fallthru
          _
      $region40: #{run.1} parent=5 // pred_fallthru
        _
    $region6: #{run.1} parent=1 // loop_footer
      %s25 = sadd.s32 1, %s21
    $region7: #{run.1} parent=1 // loop_footer_branch
      %20 = sbr.rel target = $region3
    $region8: #{run.1} parent=1 // loop_exit
      _
    %257 = vsyncpa [#allocation6], 1
    %s258 = scalar_lea.sflag [#allocation6], 1
    %259 = vsyncpa %s258, 1

</llo_original>
